<compile_context>
chip_gen: v5e
topology: v5e:2x2
jax: 0.10.0
libtpu: 0.0.40
codegen_flags: <defaults>
</compile_context>

<pallas_src>
import math

import jax
import jax.numpy as jnp
from jax import lax
from jax.experimental import pallas as pl
from jax.experimental.pallas import tpu as pltpu


def _round_up(x, m):
    return (x + m - 1) // m * m


def _gelu_exact_f32(x):
    # Exact (erf) GELU, matching torch.nn.GELU() default, in f32.
    return 0.5 * x * (1.0 + lax.erf(x * (1.0 / math.sqrt(2.0))))


def _fused_kernel(x_ref, w_ref, b_ref, o_ref):
    # x_ref: [tm, K], w_ref: [K, tn] (pre-transposed in wrapper), b_ref: [1, tn].
    acc = jnp.dot(x_ref[...], w_ref[...], preferred_element_type=jnp.float32)
    acc = acc + b_ref[...].astype(jnp.float32)
    acc = _gelu_exact_f32(acc)
    o_ref[...] = acc.astype(o_ref.dtype)        # Dropout: eval-mode identity.


def _ktiled_kernel(x_ref, w_ref, b_ref, o_ref, acc_ref):
    # Same as _fused_kernel but with a K grid axis (last, "arbitrary") and an
    # f32 VMEM accumulator that is initialized / finalized with pl.when.
    k = pl.program_id(2)

    @pl.when(k == 0)
    def _():
        acc_ref[...] = jnp.zeros_like(acc_ref)

    acc_ref[...] += jnp.dot(x_ref[...], w_ref[...],
                            preferred_element_type=jnp.float32)

    @pl.when(k == pl.num_programs(2) - 1)
    def _():
        acc = acc_ref[...] + b_ref[...].astype(jnp.float32)
        acc = _gelu_exact_f32(acc)
        o_ref[...] = acc.astype(o_ref.dtype)    # Dropout: eval-mode identity.


def linear_block_forward(x, weight, bias, *, tm_max=512, tn_max=256,
                         cast_to_bf16=False):
    """linear_block forward: GELU(x @ weight.T + bias), eval-mode dropout.

    x: [..., ch_in]; weight: [ch_out, ch_in] (torch layout); bias: [ch_out].
    """
    ch_in = x.shape[-1]
    ch_out = weight.shape[0]
    lead = x.shape[:-1]
    m = math.prod(lead) if lead else 1
    out_dtype = x.dtype

    x2d = x.reshape(m, ch_in)
    if cast_to_bf16 and x2d.dtype == jnp.float32:
        # Optional v5e/v6e throughput mode: bf16 operands, f32 accumulate.
        x2d = x2d.astype(jnp.bfloat16)
        weight = weight.astype(jnp.bfloat16)

    in_bytes = jnp.dtype(x2d.dtype).itemsize
    out_bytes = jnp.dtype(out_dtype).itemsize
    # Dtype-aware sublane multiple for the M tile (8 f32 / 16 bf16 / 32 int8).
    sub_m = {4: 8, 2: 16, 1: 32}.get(min(in_bytes, out_bytes), 8)

    # --- N padding (lane-dense stores) + one-time weight relayout to [K, N].
    n_pad = _round_up(ch_out, 128)
    w_t = weight.T                                   # [ch_in, ch_out]
    b = bias
    if n_pad != ch_out:
        w_t = jnp.pad(w_t, ((0, 0), (0, n_pad - ch_out)))
        b = jnp.pad(b, ((0, n_pad - ch_out),))
    b2d = b.reshape(1, n_pad)

    # --- Generation-aware VMEM budget.
    try:
        info = pltpu.get_tpu_info()
        vmem_cap = int(getattr(info, "vmem_capacity_bytes", 64 * 2 ** 20))
    except Exception:  # pragma: no cover - conservative fallback, all gens.
        vmem_cap = 64 * 2 ** 20
    vmem_limit = int(0.8 * vmem_cap)     # headroom for Mosaic internal scratch
    tile_budget = int(0.6 * vmem_cap)    # what the tile picker may consume

    def _ws_bytes(tm_, tn_, tk_):
        # Double-buffered X / W / bias tiles, double-buffered output tile,
        # plus the f32 dot result / accumulator staging.
        return (2 * (tm_ * tk_ + tk_ * tn_ + tn_) * in_bytes
                + 2 * tm_ * tn_ * out_bytes
                + 2 * tm_ * tn_ * 4)

    # --- Tile selection.
    tn = min(tn_max, n_pad)
    while n_pad % tn:                    # keep N tiles un-ragged (both mult of 128)
        tn -= 128
    tm = min(tm_max, _round_up(m, sub_m))
    tk = ch_in
    n_k = 1
    if _ws_bytes(tm, tn, tk) > tile_budget:
        # Prefer tiling K (keeps wide output tiles) before shrinking tm.
        for cand in (2048, 1024, 512, 256, 128):
            if cand < ch_in and _ws_bytes(tm, tn, cand) <= tile_budget:
                tk = cand
                break
        else:
            if ch_in > 128:
                tk = 128
        while _ws_bytes(tm, tn, tk) > tile_budget and tm > sub_m:
            tm = max(sub_m, (tm // 2) // sub_m * sub_m)
        n_k = pl.cdiv(ch_in, tk) if tk < ch_in else 1

    k_dim = ch_in
    if n_k > 1 and ch_in % tk:
        # Rare path (huge, non-128-multiple ch_in): zero-pad K so out-of-range
        # K elements never reach the MXU accumulator.
        k_dim = _round_up(ch_in, tk)
        x2d = jnp.pad(x2d, ((0, 0), (0, k_dim - ch_in)))
        w_t = jnp.pad(w_t, ((0, k_dim - ch_in), (0, 0)))
        n_k = k_dim // tk

    m_tiles = pl.cdiv(m, tm)
    n_tiles = pl.cdiv(n_pad, tn)

    # --- Data-driven grid ordering: the inner-axis operand is re-streamed once
    # per outer tile; pick whichever ordering moves fewer HBM bytes.
    x_bytes = m * k_dim * in_bytes
    w_bytes = n_pad * k_dim * in_bytes
    b_bytes = n_pad * jnp.dtype(b2d.dtype).itemsize
    o_bytes = m * n_pad * out_bytes
    traffic_n_outer = n_tiles * x_bytes + w_bytes   # W stationary, X re-read
    traffic_m_outer = m_tiles * w_bytes + x_bytes   # X stationary, W re-read
    n_outer = traffic_n_outer <= traffic_m_outer
    traffic = traffic_n_outer if n_outer else traffic_m_outer

    if n_k == 1:
        kernel = _fused_kernel
        scratch = ()
        if n_outer:
            grid = (n_tiles, m_tiles)
            x_map = lambda j, i: (i, 0)
            w_map = lambda j, i: (0, j)
            b_map = lambda j, i: (0, j)
            o_map = lambda j, i: (i, j)
        else:
            grid = (m_tiles, n_tiles)
            x_map = lambda i, j: (i, 0)
            w_map = lambda i, j: (0, j)
            b_map = lambda i, j: (0, j)
            o_map = lambda i, j: (i, j)
        # Both axes parallel: lets Mosaic shard across v7x's 2 TensorCores.
        semantics = ("parallel", "parallel")
        x_spec = pl.BlockSpec((tm, k_dim), x_map)
        w_spec = pl.BlockSpec((k_dim, tn), w_map)
    else:
        kernel = _ktiled_kernel
        scratch = (pltpu.VMEM((tm, tn), jnp.float32),)
        if n_outer:
            grid = (n_tiles, m_tiles, n_k)
            x_map = lambda j, i, k: (i, k)
            w_map = lambda j, i, k: (k, j)
            b_map = lambda j, i, k: (0, j)
            o_map = lambda j, i, k: (i, j)
        else:
            grid = (m_tiles, n_tiles, n_k)
            x_map = lambda i, j, k: (i, k)
            w_map = lambda i, j, k: (k, j)
            b_map = lambda i, j, k: (0, j)
            o_map = lambda i, j, k: (i, j)
        semantics = ("parallel", "parallel", "arbitrary")
        x_spec = pl.BlockSpec((tm, tk), x_map)
        w_spec = pl.BlockSpec((tk, tn), w_map)

    out = pl.pallas_call(
        kernel,
        out_shape=jax.ShapeDtypeStruct((m, n_pad), out_dtype),
        grid_spec=pltpu.PrefetchScalarGridSpec(
            num_scalar_prefetch=0,
            grid=grid,
            in_specs=[x_spec, w_spec, pl.BlockSpec((1, tn), b_map)],
            out_specs=pl.BlockSpec((tm, tn), o_map),
            scratch_shapes=scratch,
        ),
        compiler_params=pltpu.CompilerParams(
            dimension_semantics=semantics,
            vmem_limit_bytes=vmem_limit,
        ),
        cost_estimate=pl.CostEstimate(
            flops=2 * m * k_dim * n_pad,
            transcendentals=m * n_pad,
            bytes_accessed=traffic + b_bytes + o_bytes,
        ),
    )(x2d, w_t, b2d)

    if n_pad != ch_out:
        out = out[:, :ch_out]
    return out.reshape(*lead, ch_out)


def _ref_forward(x, weight, bias):
    y = jnp.einsum("...k,nk->...n", x, weight) + bias
    return jax.nn.gelu(y, approximate=False)


if __name__ == "__main__":
    key = jax.random.PRNGKey(0)
    k_x, k_w, k_b = jax.random.split(key, 3)

    B, S = 2, 8
    ch_in, ch_out = 32, 64

    # Deterministic "torch-like" init: U(-1/sqrt(ch_in), 1/sqrt(ch_in)).
    bound = 1.0 / math.sqrt(ch_in)
    weight = jax.random.uniform(k_w, (ch_out, ch_in), jnp.float32, -bound, bound)
    bias = jax.random.uniform(k_b, (ch_out,), jnp.float32, -bound, bound)

    x = jax.random.normal(k_x, (B, S, ch_in), jnp.float32)

    out = linear_block_forward(x, weight, bias)
    out = jax.block_until_ready(out)

    ref = _ref_forward(x, weight, bias)
    assert out.shape == (B, S, ch_out), out.shape
    assert jnp.allclose(out, ref, atol=1e-5, rtol=1e-5), float(
        jnp.max(jnp.abs(out - ref)))

    print("KERNEL_OK")
</pallas_src>

<mosaic_0001>
module attributes {stable_mosaic.version = 11 : i64} {
  func.func @_fused_kernel(%arg0: i32, %arg1: i32, %arg2: memref<16x32xf32, #tpu.memory_space<vmem>>, %arg3: memref<32x128xf32, #tpu.memory_space<vmem>>, %arg4: memref<1x128xf32, #tpu.memory_space<vmem>>, %arg5: memref<16x128xf32, #tpu.memory_space<vmem>>) attributes {dimension_semantics = [#tpu.dimension_semantics<parallel>, #tpu.dimension_semantics<parallel>], iteration_bounds = array<i64: 1, 1>, scalar_prefetch = 0 : i64, scratch_operands = 0 : i64, tpu.core_type = #tpu.core_type<tc>, window_params = [{transform_indices = @transform_0, window_bounds = array<i64: 16, 32>}, {transform_indices = @transform_1, window_bounds = array<i64: 32, 128>}, {transform_indices = @transform_2, window_bounds = array<i64: 1, 128>}, {transform_indices = @transform_3, window_bounds = array<i64: 16, 128>}]} {
    %c0 = arith.constant 0 : index
    %c0_0 = arith.constant 0 : index
    %0 = vector.load %arg2[%c0, %c0_0] : memref<16x32xf32, #tpu.memory_space<vmem>>, vector<16x32xf32>
    %c0_1 = arith.constant 0 : index
    %c0_2 = arith.constant 0 : index
    %1 = vector.load %arg3[%c0_1, %c0_2] : memref<32x128xf32, #tpu.memory_space<vmem>>, vector<32x128xf32>
    %cst = arith.constant dense<0.000000e+00> : vector<16x128xf32>
    %2 = tpu.matmul %0, %1, %cst {dimension_numbers = #tpu.dot_dimension_numbers<[1], [0], [0], [1], [0, 0, 1, 1], [], []>} : vector<16x32xf32>, vector<32x128xf32>, vector<16x128xf32> -> vector<16x128xf32>
    %c0_3 = arith.constant 0 : index
    %c0_4 = arith.constant 0 : index
    %3 = vector.load %arg4[%c0_3, %c0_4] : memref<1x128xf32, #tpu.memory_space<vmem>>, vector<1x128xf32>
    %4 = vector.broadcast %3 : vector<1x128xf32> to vector<16x128xf32>
    %5 = arith.addf %2, %4 : vector<16x128xf32>
    %cst_5 = arith.constant 5.000000e-01 : f32
    %6 = vector.broadcast %cst_5 : f32 to vector<16x128xf32>
    %7 = arith.mulf %6, %5 : vector<16x128xf32>
    %cst_6 = arith.constant 0.707106769 : f32
    %8 = vector.broadcast %cst_6 : f32 to vector<16x128xf32>
    %9 = arith.mulf %5, %8 : vector<16x128xf32>
    %10 = math.erf %9 : vector<16x128xf32>
    %cst_7 = arith.constant 1.000000e+00 : f32
    %11 = vector.broadcast %cst_7 : f32 to vector<16x128xf32>
    %12 = arith.addf %11, %10 : vector<16x128xf32>
    %13 = arith.mulf %7, %12 : vector<16x128xf32>
    %c0_8 = arith.constant 0 : index
    %c0_9 = arith.constant 0 : index
    %14 = vector.load %arg5[%c0_8, %c0_9] : memref<16x128xf32, #tpu.memory_space<vmem>>, vector<16x128xf32>
    tpu.vector_store %arg5[%c0_8, %c0_9], %13 {strides = array<i32>} : memref<16x128xf32, #tpu.memory_space<vmem>>, vector<16x128xf32>,
    return
  }
  func.func @transform_0(%arg0: i32, %arg1: i32) -> (i32, i32) {
    %c0_i32 = arith.constant 0 : i32
    %c0_i32_0 = arith.constant 0 : i32
    return %arg1, %c0_i32 : i32, i32
  }
  func.func @transform_1(%arg0: i32, %arg1: i32) -> (i32, i32) {
    %c0_i32 = arith.constant 0 : i32
    %c0_i32_0 = arith.constant 0 : i32
    return %c0_i32, %arg0 : i32, i32
  }
  func.func @transform_2(%arg0: i32, %arg1: i32) -> (i32, i32) {
    %c0_i32 = arith.constant 0 : i32
    %c0_i32_0 = arith.constant 0 : i32
    return %c0_i32, %arg0 : i32, i32
  }
  func.func @transform_3(%arg0: i32, %arg1: i32) -> (i32, i32) {
    %c0_i32 = arith.constant 0 : i32
    return %arg1, %arg0 : i32, i32
  }
}

</mosaic_0001>

<llo_original>
// kernel: tpu_custom_call.1
$region0: #{tpu_custom_call.1}
  #allocation0 [shape = 'u32[]', space=smem, size = 0x4, offset = 0x4, fixed_abs, tag = 'smem constant byte address 0x4 - core index']
  #allocation1 [shape = 'u32[72,128]{1,0:T(1,128)}', space=vmem, size = 0x9000, scoped, tag = 'internal scratch']
  %s0 = inlined_call_operand.hbm [shape: f32[16,32], index: 0, kind: input, shape index: {}]
  %s1 = inlined_call_operand.hbm [shape: f32[32,128], index: 1, kind: input, shape index: {}]
  %s2 = inlined_call_operand.vmem [shape: f32[1,128], index: 2, kind: input, shape index: {}]
  %s3 = inlined_call_operand.hbm [shape: f32[16,128], index: 3, kind: output, shape index: {}]
  %s4 = sld [smem:[#allocation0]]
  $region30: #{tpu_custom_call.1} parent=0
    _
  %s6 = ssub.s32 1, %s4
  %s7 = scalar_select 0, %s6, %s4
  $region1: #{tpu_custom_call.1} parent=0
    #allocation2 [shape = 'u8[8192]{0}', space=vmem, size = 0x2000, scoped, tag = 'input window, operand 0, single buffered']
    #allocation3 [shape = 's32[1]{0}', space=sflag, size = 0x4, scoped, tag = 'scoped memory for tpu_custom_call.1']
    #allocation4 [shape = 's32[1]{0}', space=sflag, size = 0x4, scoped, tag = 'scoped memory for tpu_custom_call.1']
    #allocation5 [shape = 'u8[16384]{0}', space=vmem, size = 0x4000, scoped, tag = 'input window, operand 1, single buffered']
    #allocation6 [shape = 's32[1]{0}', space=sflag, size = 0x4, scoped, tag = 'scoped memory for tpu_custom_call.1']
    #allocation7 [shape = 'u8[8192]{0}', space=vmem, size = 0x2000, scoped, tag = 'output window, operand 0, single buffered']
    %8 = vsyncpa [#allocation3], 0
    %9 = vsyncpa [#allocation6], 0
    %10 = vsyncpa [#allocation4], 0
    // Predicated region
    $region2: #{tpu_custom_call.1} parent=1 // pred_check
      _
    $region3: #{tpu_custom_call.1} parent=1 // pred_check_branch
      %12 = sbr.rel (0) target = $region5
    $region4: #{tpu_custom_call.1} parent=1 // pred_region
      %14 = vsyncadd [#allocation3], 0
      %s15 = sshll.u32 %s0, 4
      %s16 = int_to_ptr.hbm [resolvable:$true] %s15
      %s17 = sshll.u32 [#allocation2], 4
      %s18 = int_to_ptr.vmem [resolvable:$true] %s17
      %23 = dma.hbm_to_vmem [thread:$0]  %s16, 256, %s18, [#allocation3], 128, 128, 8
    $region5: #{tpu_custom_call.1} parent=1 // pred_fallthru
      _
    // Predicated region
    $region6: #{tpu_custom_call.1} parent=1 // pred_check
      _
    $region7: #{tpu_custom_call.1} parent=1 // pred_check_branch
      %25 = sbr.rel (0) target = $region9
    $region8: #{tpu_custom_call.1} parent=1 // pred_region
      %27 = vsyncadd [#allocation6], 0
      %s28 = sshll.u32 %s1, 4
      %s29 = int_to_ptr.hbm [resolvable:$true] %s28
      %s30 = sshll.u32 [#allocation5], 4
      %s31 = int_to_ptr.vmem [resolvable:$true] %s30
      %36 = dma.hbm_to_vmem [thread:$0]  %s29, 512, %s31, [#allocation6], 128, 128, 8
    $region9: #{tpu_custom_call.1} parent=1 // pred_fallthru
      _
    // Predicated region
    $region10: #{tpu_custom_call.1} parent=1 // pred_check
      _
    $region11: #{tpu_custom_call.1} parent=1 // pred_check_branch
      %38 = sbr.rel (0) target = $region13
    $region12: #{tpu_custom_call.1} parent=1 // pred_region
      _
    $region13: #{tpu_custom_call.1} parent=1 // pred_fallthru
      _
    // Predicated region
    $region14: #{tpu_custom_call.1} parent=1 // pred_check
      _
    $region15: #{tpu_custom_call.1} parent=1 // pred_check_branch
      %40 = sbr.rel (0) target = $region17
    $region16: #{tpu_custom_call.1} parent=1 // pred_region
      %42 = dma.done [#allocation3], 256
    $region17: #{tpu_custom_call.1} parent=1 // pred_fallthru
      _
    // Predicated region
    $region18: #{tpu_custom_call.1} parent=1 // pred_check
      _
    $region19: #{tpu_custom_call.1} parent=1 // pred_check_branch
      %44 = sbr.rel (0) target = $region21
    $region20: #{tpu_custom_call.1} parent=1 // pred_region
      %46 = dma.done [#allocation6], 512
    $region21: #{tpu_custom_call.1} parent=1 // pred_fallthru
      _
    %v47 = vld [vmem:[#allocation2] sm:$0xff]
    %v48 = vld [vmem:[#allocation2 + $0x8] sm:$0xff]
    %v49 = vld [vmem:[#allocation5] sm:$0xff]
    %v50 = vld [vmem:[#allocation5 + $0x8] sm:$0xff]
    %v51 = vld [vmem:[#allocation5 + $0x10] sm:$0xff]
    %v52 = vld [vmem:[#allocation5 + $0x18] sm:$0xff]
    %v53 = vld [vmem:[%s2] sm:$0x1]
    %v55 = vperm.slane %v53, 0
    %vm57 = vcmask 261120
    %v59 = vsel %vm57, %v47, 0
    %v62 = vsel %vm57, %v48, 0
    %64 = vmatpush.msra.mxu0 0.0
    %65 = vmatpush.msra.mxu0 0.0
    %66 = vmatpush.msra.mxu0 0.0
    %67 = vmatpush.msra.mxu0 0.0
    %68 = vmatpush.msra.mxu0 0.0
    %69 = vmatpush.msra.mxu0 0.0
    %70 = vmatpush.msra.mxu0 0.0
    %71 = vmatpush.msra.mxu0 0.0
    %72 = vmatpush.msra.mxu0 0.0
    %73 = vmatpush.msra.mxu0 0.0
    %74 = vmatpush.msra.mxu0 0.0
    %75 = vmatpush.msra.mxu0 0.0
    %76 = vmatpush.msra.mxu0 %v52
    %77 = vmatpush.msra.mxu0 %v51
    %78 = vmatpush.msra.mxu0 %v50
    %79 = vmatpush.msra.mxu0 %v49
    %80 = vmatmul.f32.gmra.mxu0 %v59
    %v81 = vpop.f32.mrf.mxu0
    %v82 = vadd.f32 %v55, %v81
    %83 = vmatmul.f32.gmra.mxu0 %v62
    %v84 = vpop.f32.mrf.mxu0
    %v85 = vadd.f32 %v55, %v84
    %86 = vdwg.mxu0
    %v87 = vmul.f32 %v82, 0.5
    %v88 = vmul.f32 %v85, 0.5
    %v89 = vmul.f32 %v82, 0.70710677
    %v90 = vmul.f32 %v85, 0.70710677
    %v91 = vmul.f32 %v89, %v89
    %v92 = vmin.f32 16.0, %v91
    %v93 = vmul.f32 %v92, 2.1237322e-06
    %v94 = vadd.f32 %v93, 0.00028619796
    %v95 = vmul.f32 %v92, %v94
    %v96 = vadd.f32 %v95, 0.0036580483
    %v97 = vmul.f32 %v92, %v96
    %v98 = vadd.f32 %v97, 0.05243302
    %v99 = vmul.f32 %v92, %v98
    %v100 = vadd.f32 %v99, 0.18741608
    %v101 = vmul.f32 %v92, %v100
    %v102 = vadd.f32 %v101, 1.1283791
    %v103 = vmul.f32 %v89, %v102
    %v104 = vmul.f32 %v92, 3.8918573e-05
    %v105 = vadd.f32 %v104, 0.001143296
    %v106 = vmul.f32 %v92, %v105
    %v107 = vadd.f32 %v106, 0.014752088
    %v108 = vmul.f32 %v92, %v107
    %v109 = vadd.f32 %v108, 0.112945676
    %v110 = vmul.f32 %v92, %v109
    %v111 = vadd.f32 %v110, 0.4994258
    %v112 = vmul.f32 %v92, %v111
    %v113 = vadd.f32 %v112, 1.0
    %v114 = vrcp.pop %v113
    %v115 = vmul.f32 %v113, %v114
    %v116 = vsub.f32 1.0, %v115
    %v117 = vmul.f32 %v114, %v116
    %v118 = vadd.f32 %v114, %v117
    %vm119 = vweird.f32 %v113
    %vm120 = vweird.f32 %v114
    %vm121 = vmor %vm119, %vm120
    %v122 = vsel %vm121, %v114, %v118
    %v123 = vand.u32 2147483647, %v113
    %vm124 = vcmp.eq.f32.partialorder %v123, 8.507059e+37
    %v125 = vand.u32 %v113, 2147483648
    %v126 = vor.u32 1.1754944e-38, %v125
    %v127 = vsel %vm124, %v126, %v122
    %v128 = vmul.f32 %v103, %v127
    %v129 = vmin.f32 %v128, 1.0
    %v130 = vmax.f32 %v129, -1.0
    %v131 = vmul.f32 %v90, %v90
    %v132 = vmin.f32 16.0, %v131
    %v133 = vmul.f32 %v132, 2.1237322e-06
    %v134 = vadd.f32 %v133, 0.00028619796
    %v135 = vmul.f32 %v132, %v134
    %v136 = vadd.f32 %v135, 0.0036580483
    %v137 = vmul.f32 %v132, %v136
    %v138 = vadd.f32 %v137, 0.05243302
    %v139 = vmul.f32 %v132, %v138
    %v140 = vadd.f32 %v139, 0.18741608
    %v141 = vmul.f32 %v132, %v140
    %v142 = vadd.f32 %v141, 1.1283791
    %v143 = vmul.f32 %v90, %v142
    %v144 = vmul.f32 %v132, 3.8918573e-05
    %v145 = vadd.f32 %v144, 0.001143296
    %v146 = vmul.f32 %v132, %v145
    %v147 = vadd.f32 %v146, 0.014752088
    %v148 = vmul.f32 %v132, %v147
    %v149 = vadd.f32 %v148, 0.112945676
    %v150 = vmul.f32 %v132, %v149
    %v151 = vadd.f32 %v150, 0.4994258
    %v152 = vmul.f32 %v132, %v151
    %v153 = vadd.f32 %v152, 1.0
    %v154 = vrcp.pop %v153
    %v155 = vmul.f32 %v153, %v154
    %v156 = vsub.f32 1.0, %v155
    %v157 = vmul.f32 %v154, %v156
    %v158 = vadd.f32 %v154, %v157
    %vm159 = vweird.f32 %v153
    %vm160 = vweird.f32 %v154
    %vm161 = vmor %vm159, %vm160
    %v162 = vsel %vm161, %v154, %v158
    %v163 = vand.u32 2147483647, %v153
    %vm164 = vcmp.eq.f32.partialorder %v163, 8.507059e+37
    %v165 = vand.u32 %v153, 2147483648
    %v166 = vor.u32 1.1754944e-38, %v165
    %v167 = vsel %vm164, %v166, %v162
    %v168 = vmul.f32 %v143, %v167
    %v169 = vmin.f32 %v168, 1.0
    %v170 = vmax.f32 %v169, -1.0
    %v171 = vadd.f32 %v130, 1.0
    %v172 = vadd.f32 %v170, 1.0
    %v173 = vmul.f32 %v87, %v171
    %v174 = vmul.f32 %v88, %v172
    %175 = vst [vmem:[#allocation7] sm:$0xff] %v173
    %176 = vst [vmem:[#allocation7 + $0x8] sm:$0xff] %v174
    // Predicated region
    $region22: #{tpu_custom_call.1} parent=1 // pred_check
      _
    $region23: #{tpu_custom_call.1} parent=1 // pred_check_branch
      %178 = sbr.rel (0) target = $region25
    $region24: #{tpu_custom_call.1} parent=1 // pred_region
      %180 = vsyncadd [#allocation4], 0
      %s181 = sshll.u32 [#allocation7], 4
      %s182 = int_to_ptr.vmem [resolvable:$true] %s181
      %s183 = sshll.u32 %s3, 4
      %s184 = int_to_ptr.hbm [resolvable:$true] %s183
      %189 = dma.vmem_to_hbm [thread:$0]  %s182, 256, %s184, [#allocation4], 128, 128, 8
    $region25: #{tpu_custom_call.1} parent=1 // pred_fallthru
      _
    // Predicated region
    $region26: #{tpu_custom_call.1} parent=1 // pred_check
      _
    $region27: #{tpu_custom_call.1} parent=1 // pred_check_branch
      %191 = sbr.rel (0) target = $region29
    $region28: #{tpu_custom_call.1} parent=1 // pred_region
      %193 = dma.done [#allocation4], 256
    $region29: #{tpu_custom_call.1} parent=1 // pred_fallthru
      _
    %194 = vsyncpa [#allocation3], 1
    %195 = vsyncpa [#allocation6], 1
    %196 = vsyncpa [#allocation4], 1

</llo_original>
